<compile_context>
chip_gen: v6e
topology: v6e:2x2x1
jax: 0.10.0
libtpu: 0.0.40
codegen_flags: <defaults>
</compile_context>

<pallas_src>
import functools

import jax
import jax.numpy as jnp
from jax.experimental import pallas as pl
from jax.experimental.pallas import tpu as pltpu


def _round_up(v, m):
    return (v + m - 1) // m * m


def _patch_embed_kernel(p_ref, w_ref, b_ref, o_ref):
    # p_ref: (TM, K_pad)  w_ref: (K_pad, E_pad)  b_ref: (1, E_pad)  o_ref: (TM, E_pad)
    acc = jnp.dot(p_ref[...], w_ref[...], preferred_element_type=jnp.float32)
    o_ref[...] = (acc + b_ref[...]).astype(o_ref.dtype)


def _tile_vmem_bytes(tm, k_pad, e_pad, in_item, out_item):
    # Double-buffered patch + output tiles, double-buffered (but fetched-once)
    # weight, sublane-padded f32 bias.
    return (2 * tm * k_pad * in_item
            + 2 * k_pad * e_pad * in_item
            + 2 * 8 * e_pad * 4
            + 2 * tm * e_pad * out_item)


@functools.partial(
    jax.jit, static_argnames=("patch_size", "compute_dtype", "out_dtype"))
def patch_embed_pallas(x, weight, bias, patch_size,
                       compute_dtype=jnp.bfloat16, out_dtype=None):
    """ViT PatchEmbed forward.

    x: (B, C, H, W) NCHW image, weight: (E, C, P, P) Conv2d weight, bias: (E,)
    Returns (B, n_patches, E) == `proj(x).flatten(2).transpose(1, 2)`.
    """
    B, C, H, W = x.shape
    E = weight.shape[0]
    P = patch_size
    hp, wp = H // P, W // P
    n_patches = hp * wp
    patch_dim = C * P * P
    M = B * n_patches

    out_dt = jnp.dtype(out_dtype) if out_dtype is not None else jnp.dtype(x.dtype)
    in_item = jnp.dtype(compute_dtype).itemsize
    out_item = out_dt.itemsize
    row_align = {4: 8, 2: 16, 1: 32}[in_item]   # sublane packing per dtype width

    # --- layout glue (allow_input_fusion lets XLA fold this into the input DMA)
    patches = x.reshape(B, C, hp, P, wp, P)
    patches = patches.transpose(0, 2, 4, 1, 3, 5)          # (B, hp, wp, C, P, P)
    patches = patches.reshape(M, patch_dim).astype(compute_dtype)

    # Conv2d weight (E, C, P, P) -> (K, E) so that patch @ w == conv at that loc.
    # TODO(synk): fold this one-time transpose into parameter init in a real model.
    w = weight.reshape(E, patch_dim).T.astype(compute_dtype)

    # --- lane/MXU aligned padding (K is already 128-aligned for standard ViT,
    # e.g. 3*16*16 = 768, so these usually no-op)
    K_pad = _round_up(patch_dim, 128)
    E_pad = _round_up(E, 128)

    # --- M tiling: whole weight stays VMEM resident, grid is 1-D over M.
    # Pick the largest lane-dense TM that fits a v7x-safe VMEM budget, but
    # keep >= 2 grid steps so both v7x TensorCores get balanced work.
    VMEM_BUDGET = 48 * 1024 * 1024
    TM = min(512, _round_up(M, row_align))
    while TM > row_align and -(-M // TM) < 2:
        TM = _round_up(TM // 2, row_align)
    while (TM > row_align and
           _tile_vmem_bytes(TM, K_pad, E_pad, in_item, out_item) > VMEM_BUDGET):
        TM = _round_up(TM // 2, row_align)
    # TODO(synk): fall back to an E-tiled 2-D grid if K_pad*E_pad alone ever
    # exceeds the VMEM budget (never the case for realistic PatchEmbed sizes).
    M_pad = _round_up(M, TM)

    if (M_pad, K_pad) != (M, patch_dim):
        patches = jnp.pad(patches, ((0, M_pad - M), (0, K_pad - patch_dim)))
    if (K_pad, E_pad) != (patch_dim, E):
        w = jnp.pad(w, ((0, K_pad - patch_dim), (0, E_pad - E)))
    b = jnp.pad(bias.astype(jnp.float32), (0, E_pad - E)).reshape(1, E_pad)

    grid = (M_pad // TM,)

    # Exact traffic: every operand is touched exactly once under this grid.
    cost = pl.CostEstimate(
        flops=2 * M_pad * K_pad * E_pad,
        transcendentals=0,
        bytes_accessed=(M_pad * K_pad * in_item      # patches: streamed once
                        + K_pad * E_pad * in_item    # weight: fetched once (resident)
                        + E_pad * 4                  # bias
                        + M_pad * E_pad * out_item), # output: written once
    )

    vmem_limit = min(
        max(2 * _tile_vmem_bytes(TM, K_pad, E_pad, in_item, out_item),
            16 * 1024 * 1024),
        VMEM_BUDGET)

    out = pl.pallas_call(
        _patch_embed_kernel,
        out_shape=jax.ShapeDtypeStruct((M_pad, E_pad), out_dt),
        grid_spec=pltpu.PrefetchScalarGridSpec(
            num_scalar_prefetch=0,
            grid=grid,
            in_specs=[
                # patch tiles stream over M
                pl.BlockSpec((TM, K_pad), lambda m: (m, 0)),
                # full weight / bias: constant block index -> DMA'd once and
                # kept VMEM-resident across the whole M sweep.
                # (pipeline_mode=pl.Buffered(1) could halve their footprint,
                #  but the saving is ~1 MiB for ViT-B and immaterial here.)
                pl.BlockSpec((K_pad, E_pad), lambda m: (0, 0)),
                pl.BlockSpec((1, E_pad), lambda m: (0, 0)),
            ],
            out_specs=pl.BlockSpec((TM, E_pad), lambda m: (m, 0)),
        ),
        compiler_params=pltpu.CompilerParams(
            dimension_semantics=("parallel",),
            allow_input_fusion=[True, True, False],
            vmem_limit_bytes=vmem_limit,
        ),
        cost_estimate=cost,
    )(patches, w, b)

    if (M_pad, E_pad) != (M, E):      # skip the slice pass when nothing was padded
        out = out[:M, :E]
    return out.reshape(B, n_patches, E)


if __name__ == "__main__":
    # Small shapes consistent with the module's forward:
    # batch=2, in_chans=4, img_size=16, patch_size=4, embed_dim=32
    B, C, IMG, P, E = 2, 4, 16, 4, 32

    key = jax.random.PRNGKey(0)
    kx, kw, kb = jax.random.split(key, 3)
    x = jax.random.normal(kx, (B, C, IMG, IMG), dtype=jnp.float32)
    weight = jax.random.normal(kw, (E, C, P, P), dtype=jnp.float32) * 0.02
    bias = jax.random.normal(kb, (E,), dtype=jnp.float32) * 0.02

    # reference: strided conv == per-patch linear projection, plain JAX
    hp = wp = IMG // P
    ref_patches = x.reshape(B, C, hp, P, wp, P).transpose(0, 2, 4, 1, 3, 5)
    ref_patches = ref_patches.reshape(B, hp * wp, C * P * P)
    ref = ref_patches @ weight.reshape(E, -1).T + bias[None, None, :]

    # f32 compute path (same MXU default precision as the reference matmul)
    out_f32 = jax.block_until_ready(
        patch_embed_pallas(x, weight, bias, P, compute_dtype=jnp.float32))
    assert out_f32.shape == (B, (IMG // P) ** 2, E)
    assert jnp.allclose(out_f32, ref, atol=1e-5, rtol=1e-5)

    # default fast path: bf16 inputs (MXU fast path), f32 accumulation,
    # bf16 output stream
    out_bf16 = jax.block_until_ready(
        patch_embed_pallas(x, weight, bias, P, out_dtype=jnp.bfloat16))
    assert out_bf16.shape == (B, (IMG // P) ** 2, E)
    assert out_bf16.dtype == jnp.bfloat16
    assert jnp.allclose(out_bf16.astype(jnp.float32), ref, atol=5e-2, rtol=5e-2)

    print("KERNEL_OK")
</pallas_src>

<mosaic_0001>
module attributes {stable_mosaic.version = 11 : i64} {
  func.func @_patch_embed_kernel(%arg0: i32, %arg1: memref<16x128xf32, #tpu.memory_space<vmem>>, %arg2: memref<128x128xf32, #tpu.memory_space<vmem>>, %arg3: memref<1x128xf32, #tpu.memory_space<vmem>>, %arg4: memref<16x128xf32, #tpu.memory_space<vmem>>) attributes {dimension_semantics = [#tpu.dimension_semantics<parallel>], iteration_bounds = array<i64: 2>, scalar_prefetch = 0 : i64, scratch_operands = 0 : i64, tpu.core_type = #tpu.core_type<tc>, window_params = [{transform_indices = @transform_0, window_bounds = array<i64: 16, 128>}, {pipeline_mode = #tpu.pipeline_mode<synchronous>, transform_indices = @transform_1, window_bounds = array<i64: 128, 128>}, {pipeline_mode = #tpu.pipeline_mode<synchronous>, transform_indices = @transform_2, window_bounds = array<i64: 1, 128>}, {transform_indices = @transform_3, window_bounds = array<i64: 16, 128>}]} {
    %c0 = arith.constant 0 : index
    %c0_0 = arith.constant 0 : index
    %0 = vector.load %arg1[%c0, %c0_0] : memref<16x128xf32, #tpu.memory_space<vmem>>, vector<16x128xf32>
    %c0_1 = arith.constant 0 : index
    %c0_2 = arith.constant 0 : index
    %1 = vector.load %arg2[%c0_1, %c0_2] : memref<128x128xf32, #tpu.memory_space<vmem>>, vector<128x128xf32>
    %cst = arith.constant dense<0.000000e+00> : vector<16x128xf32>
    %2 = tpu.matmul %0, %1, %cst {dimension_numbers = #tpu.dot_dimension_numbers<[1], [0], [0], [1], [0, 0, 1, 1], [], []>} : vector<16x128xf32>, vector<128x128xf32>, vector<16x128xf32> -> vector<16x128xf32>
    %c0_3 = arith.constant 0 : index
    %c0_4 = arith.constant 0 : index
    %3 = vector.load %arg3[%c0_3, %c0_4] : memref<1x128xf32, #tpu.memory_space<vmem>>, vector<1x128xf32>
    %4 = vector.broadcast %3 : vector<1x128xf32> to vector<16x128xf32>
    %5 = arith.addf %2, %4 : vector<16x128xf32>
    %c0_5 = arith.constant 0 : index
    %c0_6 = arith.constant 0 : index
    %6 = vector.load %arg4[%c0_5, %c0_6] : memref<16x128xf32, #tpu.memory_space<vmem>>, vector<16x128xf32>
    tpu.vector_store %arg4[%c0_5, %c0_6], %5 {strides = array<i32>} : memref<16x128xf32, #tpu.memory_space<vmem>>, vector<16x128xf32>,
    return
  }
  func.func @transform_0(%arg0: i32) -> (i32, i32) {
    %c0_i32 = arith.constant 0 : i32
    %c0_i32_0 = arith.constant 0 : i32
    return %arg0, %c0_i32 : i32, i32
  }
  func.func @transform_1(%arg0: i32) -> (i32, i32) {
    %c0_i32 = arith.constant 0 : i32
    %c0_i32_0 = arith.constant 0 : i32
    %c0_i32_1 = arith.constant 0 : i32
    return %c0_i32, %c0_i32_0 : i32, i32
  }
  func.func @transform_2(%arg0: i32) -> (i32, i32) {
    %c0_i32 = arith.constant 0 : i32
    %c0_i32_0 = arith.constant 0 : i32
    %c0_i32_1 = arith.constant 0 : i32
    return %c0_i32, %c0_i32_0 : i32, i32
  }
  func.func @transform_3(%arg0: i32) -> (i32, i32) {
    %c0_i32 = arith.constant 0 : i32
    %c0_i32_0 = arith.constant 0 : i32
    return %arg0, %c0_i32 : i32, i32
  }
}

</mosaic_0001>

<llo_original>
// kernel: patch_embed_pallas.2
$region0: #{patch_embed_pallas.2}
  #allocation0 [shape = 'u32[]', space=smem, size = 0x4, offset = 0x4, fixed_abs, tag = 'smem constant byte address 0x4 - core index']
  #allocation1 [shape = 'u32[144,128]{1,0:T(1,128)}', space=vmem, size = 0x12000, scoped, tag = 'internal scratch']
  #allocation2 [shape = 'u32[2048]{0}', space=vmem, size = 0x2000, scoped, tag = 'scoped memory for patch_embed_pallas.2']
  #allocation3 [shape = 'u32[2048]{0}', space=vmem, size = 0x2000, scoped, tag = 'scoped memory for patch_embed_pallas.2']
  #allocation4 [shape = 'u32[2048]{0}', space=vmem, size = 0x2000, scoped, tag = 'scoped memory for patch_embed_pallas.2']
  #allocation5 [shape = 'u32[2048]{0}', space=vmem, size = 0x2000, scoped, tag = 'scoped memory for patch_embed_pallas.2']
  #allocation6 [shape = 'u32[2048]{0}', space=vmem, size = 0x2000, scoped, tag = 'scoped memory for patch_embed_pallas.2']
  #allocation7 [shape = 'u32[2048]{0}', space=vmem, size = 0x2000, scoped, tag = 'scoped memory for patch_embed_pallas.2']
  #allocation8 [shape = 'u32[2048]{0}', space=vmem, size = 0x2000, scoped, tag = 'scoped memory for patch_embed_pallas.2']
  #allocation9 [shape = 'u32[2048]{0}', space=vmem, size = 0x2000, scoped, tag = 'scoped memory for patch_embed_pallas.2']
  #allocation10 [shape = 'u32[2048]{0}', space=vmem, size = 0x2000, scoped, tag = 'scoped memory for patch_embed_pallas.2']
  #allocation11 [shape = 'u32[2048]{0}', space=vmem, size = 0x2000, scoped, tag = 'scoped memory for patch_embed_pallas.2']
  %s0 = inlined_call_operand.vmem [shape: f32[1,128], index: 0, kind: input, shape index: {}]
  %s1 = inlined_call_operand.vmem [shape: f32[64,32], index: 1, kind: input, shape index: {}]
  %s2 = inlined_call_operand.<no memory space> [shape: f32[], index: 2, kind: input, shape index: {}]
  %s3 = inlined_call_operand.vmem [shape: f32[32,64], index: 3, kind: input, shape index: {}]
  %s4 = inlined_call_operand.hbm [shape: f32[32,128], index: 4, kind: output, shape index: {}]
  %s5 = sld [smem:[#allocation0]]
  $region45: #{patch_embed_pallas.2} parent=0
    _
  %s7 = ssub.s32 1, %s5
  %s8 = scalar_select 0, %s7, %s5
  %v9 = vstv %s2
  %v10 = vstv %s2
  $region1: #{patch_embed_pallas.2} parent=0
    #allocation12 [shape = 'u8[16384]{0}', space=vmem, size = 0x4000, scoped, tag = 'output window, operand 0']
    #allocation13 [shape = 's32[2]{0}', space=sflag, size = 0x8, scoped, tag = 'scoped memory for patch_embed_pallas.2']
    %11 = vsyncpa [#allocation13], 0
    %s12 = scalar_lea.sflag [#allocation13], 1
    %13 = vsyncpa %s12, 0
    loop: start=0, step=1, limit=4
    $region2: #{patch_embed_pallas.2} parent=1 // loop_pre_header
      _
    $region3: #{patch_embed_pallas.2} parent=1 // loop_header
      %s15 = sphi 0, %s19
      %p16 = scmp.ge.s32.totalorder %s15, 4
      %s25 = sphi 0, %s27
      %s28 = sphi 0, %s25
      %s29 = sphi 0, %s28
      %s45 = sphi 0, %s29
      %s49 = sphi 0, %s49
      %s51 = sphi 0, %s49
      %s52 = sphi 0, %s51
      %s66 = sphi 0, %s52
      %s70 = sphi 0, %s70
      %s72 = sphi 0, %s70
      %s73 = sphi 0, %s72
      %s87 = sphi 0, %s73
      %s93 = sphi 0, %s95
      %s96 = sphi 0, %s93
      %s97 = sphi 0, %s96
      %s113 = sphi 0, %s97
    $region4: #{patch_embed_pallas.2} parent=1 // loop_header_branch
      %18 = sbr.rel (%p16) target = $region8
    $region5: #{patch_embed_pallas.2} parent=1 // loop_body
      %s20 = ssub.s32 %s15, 1
      %s21 = ssub.s32 %s15, 2
      %s22 = sadd.s32 %s15, 1
      %s23 = ssub.s32 %s15, %s22
      %p24 = scmp.eq.s32.totalorder %s23, 0
      %s26 = sadd.s32 %s25, 1
      %s27 = scalar_select %p24, %s25, %s26
      %p30 = pneg %p24
      %p31 = scmp.eq.s32.totalorder %s15, 1
      %p32 = por %p30, %p31
      %p33 = scmp.ne.s32.totalorder %s25, %s28
      %p34 = scmp.eq.s32.totalorder %s15, 0
      %p35 = por %p33, %p34
      %p36 = scmp.ne.s32.totalorder %s25, %s28
      %p37 = scmp.eq.s32.totalorder %s20, 1
      %p38 = por %p36, %p37
      %p39 = scmp.ne.s32.totalorder %s28, %s29
      %p40 = scmp.eq.s32.totalorder %s20, 0
      %p41 = por %p39, %p40
      %p42 = scmp.ne.s32.totalorder %s28, %s29
      %p43 = scmp.eq.s32.totalorder %s21, 1
      %p44 = por %p42, %p43
      %p46 = scmp.ne.s32.totalorder %s29, %s45
      %p47 = scmp.eq.s32.totalorder %s21, 0
      %p48 = por %p46, %p47
      %s50 = sadd.s32 %s49, 1
      %p53 = scmp.eq.s32.totalorder %s15, 1
      %p54 = scmp.ne.s32.totalorder %s49, %s51
      %p55 = scmp.eq.s32.totalorder %s15, 0
      %p56 = por %p54, %p55
      %p57 = scmp.ne.s32.totalorder %s49, %s51
      %p58 = scmp.eq.s32.totalorder %s20, 1
      %p59 = por %p57, %p58
      %p60 = scmp.ne.s32.totalorder %s51, %s52
      %p61 = scmp.eq.s32.totalorder %s20, 0
      %p62 = por %p60, %p61
      %p63 = scmp.ne.s32.totalorder %s51, %s52
      %p64 = scmp.eq.s32.totalorder %s21, 1
      %p65 = por %p63, %p64
      %p67 = scmp.ne.s32.totalorder %s52, %s66
      %p68 = scmp.eq.s32.totalorder %s21, 0
      %p69 = por %p67, %p68
      %s71 = sadd.s32 %s70, 1
      %p74 = scmp.eq.s32.totalorder %s15, 1
      %p75 = scmp.ne.s32.totalorder %s70, %s72
      %p76 = scmp.eq.s32.totalorder %s15, 0
      %p77 = por %p75, %p76
      %p78 = scmp.ne.s32.totalorder %s70, %s72
      %p79 = scmp.eq.s32.totalorder %s20, 1
      %p80 = por %p78, %p79
      %p81 = scmp.ne.s32.totalorder %s72, %s73
      %p82 = scmp.eq.s32.totalorder %s20, 0
      %p83 = por %p81, %p82
      %p84 = scmp.ne.s32.totalorder %s72, %s73
      %p85 = scmp.eq.s32.totalorder %s21, 1
      %p86 = por %p84, %p85
      %p88 = scmp.ne.s32.totalorder %s73, %s87
      %p89 = scmp.eq.s32.totalorder %s21, 0
      %p90 = por %p88, %p89
      %s91 = ssub.s32 %s15, %s22
      %p92 = scmp.eq.s32.totalorder %s91, 0
      %s94 = sadd.s32 %s93, 1
      %s95 = scalar_select %p92, %s93, %s94
      %p98 = pneg %p92
      %p99 = scmp.eq.s32.totalorder %s15, 1
      %p100 = por %p98, %p99
      %p101 = scmp.ne.s32.totalorder %s93, %s96
      %p102 = scmp.eq.s32.totalorder %s15, 0
      %p103 = por %p101, %p102
      %p104 = scmp.ne.s32.totalorder %s93, %s96
      %p105 = scmp.eq.s32.totalorder %s20, 1
      %p106 = por %p104, %p105
      %p107 = scmp.ne.s32.totalorder %s96, %s97
      %p108 = scmp.eq.s32.totalorder %s20, 0
      %p109 = por %p107, %p108
      %p110 = scmp.ne.s32.totalorder %s96, %s97
      %p111 = scmp.eq.s32.totalorder %s21, 1
      %p112 = por %p110, %p111
      %p114 = scmp.ne.s32.totalorder %s97, %s113
      %p115 = scmp.eq.s32.totalorder %s21, 0
      %p116 = por %p114, %p115
      %p117 = scmp.le.s32.totalorder 1, %s15
      %p118 = scmp.lt.s32.totalorder %s15, 3
      %p119 = pnand %p117, %p118
      %p120 = pneg %p119
      // Predicated region
      $region9: #{patch_embed_pallas.2} parent=5 // pred_check
        _
      $region10: #{patch_embed_pallas.2} parent=5 // pred_check_branch
        %122 = sbr.rel (%p119) target = $region12
      $region11: #{patch_embed_pallas.2} parent=5 // pred_region
        %s123 = ssub.s32 %s15, 1
        // Predicated region
        $region13: #{patch_embed_pallas.2} parent=11 // pred_check
          %p124 = pneg %p62
        $region14: #{patch_embed_pallas.2} parent=11 // pred_check_branch
          %126 = sbr.rel (%p124) target = $region16
        $region15: #{patch_embed_pallas.2} parent=11 // pred_region
          _
        $region16: #{patch_embed_pallas.2} parent=11 // pred_fallthru
          _
        // Predicated region
        $region17: #{patch_embed_pallas.2} parent=11 // pred_check
          %p127 = pneg %p83
        $region18: #{patch_embed_pallas.2} parent=11 // pred_check_branch
          %129 = sbr.rel (%p127) target = $region20
        $region19: #{patch_embed_pallas.2} parent=11 // pred_region
          _
        $region20: #{patch_embed_pallas.2} parent=11 // pred_fallthru
          _
      $region12: #{patch_embed_pallas.2} parent=5 // pred_fallthru
        _
      %p130 = scmp.lt.s32.totalorder %s15, 2
      // Predicated region
      $region21: #{patch_embed_pallas.2} parent=5 // pred_check
        %p131 = pneg %p130
      $region22: #{patch_embed_pallas.2} parent=5 // pred_check_branch
        %133 = sbr.rel (%p131) target = $region24
      $region23: #{patch_embed_pallas.2} parent=5 // pred_region
        // Predicated region
        $region25: #{patch_embed_pallas.2} parent=23 // pred_check
          %p134 = pneg %p35
        $region26: #{patch_embed_pallas.2} parent=23 // pred_check_branch
          %136 = sbr.rel (%p134) target = $region28
        $region27: #{patch_embed_pallas.2} parent=23 // pred_region
          %s137 = smul.u32 2, %s15
          %p138 = scmp.lt.s32.totalorder %s137, 3
          %s139 = scalar_select %p138, %s137, 3
          %s140 = smul.addr %s139, 8
          %s141 = scalar_lea.vmem %s3, %s140
          %s142 = smul.u32 2, %s15
        $region28: #{patch_embed_pallas.2} parent=23 // pred_fallthru
          _
      $region24: #{patch_embed_pallas.2} parent=5 // pred_fallthru
        _
      %p143 = scmp.le.s32.totalorder 1, %s15
      %p144 = scmp.lt.s32.totalorder %s15, 3
      %p145 = pnand %p143, %p144
      %p146 = pneg %p145
      // Predicated region
      $region29: #{patch_embed_pallas.2} parent=5 // pred_check
        _
      $region30: #{patch_embed_pallas.2} parent=5 // pred_check_branch
        %148 = sbr.rel (%p145) target = $region32
      $region31: #{patch_embed_pallas.2} parent=5 // pred_region
        #allocation14 [shape = 'u8[8192]{0}', space=vmem, size = 0x2000, dematerialized = true, scoped, tag = 'FusionAdapter Buffer %fusion.2 = f32[32,128]{1,0:T(8,128)} fusion(%param_3.1, %param_2.2), kind=kLoop, calls=%fused_computation.3.clone, metadata={op_name="jit(patch_embed_pallas)/jit(_pad)/pad" stack_frame_id=11}']
        #allocation15 [shape = 'u8[65536]{0}', space=vmem, size = 0x10000, dematerialized = true, scoped, tag = 'FusionAdapter Buffer %fusion.1 = f32[128,128]{1,0:T(8,128)} fusion(%param_1.3, %param_2.2), kind=kLoop, calls=%fused_computation.2.clone, metadata={op_name="jit(patch_embed_pallas)/jit(_pad)/pad" stack_frame_id=12}']
        %s149 = ssub.s32 %s15, 1
        %s150 = smul.u32 2, %s20
        %p151 = scmp.lt.s32.totalorder %s150, 3
        %s152 = scalar_select %p151, %s150, 3
        %s153 = smul.addr %s152, 8
        %s154 = scalar_lea.vmem %s3, %s153
        %p155 = pneg %p41
        %p156 = pneg %p38
        %p157 = pneg %p62
        %p158 = pneg %p59
        %p159 = pneg %p83
        %p160 = pneg %p80
        %p161 = pneg %p109
        %p162 = pneg %p106
        %s163 = sand.u32 %s96, 1
        %s164 = scalar_lea.sflag [#allocation13], %s163
        %s165 = sand.u32 %s96, 1
        %s166 = smul.addr %s165, 16
        %s167 = scalar_lea.vmem [#allocation12], %s166
        %s168 = smul.u32 2, %s20
        %p169 = scmp.lt.s32.totalorder %s168, 3
        %s170 = scalar_select %p169, %s168, 3
        %s171 = smul.addr %s170, 8
        %s172 = scalar_lea.vmem %s3, %s171
        %s173 = smul.u32 2, %s20
        %s174 = smul.u32 2, %s20
        %v175 = vld [vmem:[%s172] sm:$0xff]
        %v176 = vlaneseq
        %v177 = vand.u32 %v176, 127
        %vm179 = vcmp.lt.s32.totalorder %v177, 64
        %v180 = vsel %vm179, %v175, %v9
        %s182 = ssub.s32 256, 1
        %183 = vst [vmem:[#allocation14] sm:%s182] %v180
        %s184 = scalar_lea.vmem %s172, 8
        %v185 = vld [vmem:[%s184] sm:$0xff]
        %v186 = vlaneseq
        %v187 = vand.u32 %v186, 127
        %vm189 = vcmp.lt.s32.totalorder %v187, 64
        %v190 = vsel %vm189, %v185, %v9
        %s191 = scalar_lea.vmem [#allocation14], 8
        %s193 = ssub.s32 256, 1
        %194 = vst [vmem:[%s191] sm:%s193] %v190
        %v195 = vld [vmem:[%s1] sm:$0xff]
        %v196 = vlaneseq
        %v197 = vand.u32 %v196, 127
        %vm199 = vcmp.lt.s32.totalorder %v197, 32
        %v200 = vsel %vm199, %v195, %v10
        %s202 = ssub.s32 256, 1
        %203 = vst [vmem:[#allocation15] sm:%s202] %v200
        %s204 = scalar_lea.vmem %s1, 8
        %v205 = vld [vmem:[%s204] sm:$0xff]
        %v206 = vlaneseq
        %v207 = vand.u32 %v206, 127
        %vm209 = vcmp.lt.s32.totalorder %v207, 32
        %v210 = vsel %vm209, %v205, %v10
        %s211 = scalar_lea.vmem [#allocation15], 8
        %s213 = ssub.s32 256, 1
        %214 = vst [vmem:[%s211] sm:%s213] %v210
        %s215 = scalar_lea.vmem %s1, 16
        %v216 = vld [vmem:[%s215] sm:$0xff]
        %v217 = vlaneseq
        %v218 = vand.u32 %v217, 127
        %vm220 = vcmp.lt.s32.totalorder %v218, 32
        %v221 = vsel %vm220, %v216, %v10
        %s222 = scalar_lea.vmem [#allocation15], 16
        %s224 = ssub.s32 256, 1
        %225 = vst [vmem:[%s222] sm:%s224] %v221
        %s226 = scalar_lea.vmem %s1, 24
        %v227 = vld [vmem:[%s226] sm:$0xff]
        %v228 = vlaneseq
        %v229 = vand.u32 %v228, 127
        %vm231 = vcmp.lt.s32.totalorder %v229, 32
        %v232 = vsel %vm231, %v227, %v10
        %s233 = scalar_lea.vmem [#allocation15], 24
        %s235 = ssub.s32 256, 1
        %236 = vst [vmem:[%s233] sm:%s235] %v232
        %s237 = scalar_lea.vmem %s1, 32
        %v238 = vld [vmem:[%s237] sm:$0xff]
        %v239 = vlaneseq
        %v240 = vand.u32 %v239, 127
        %vm242 = vcmp.lt.s32.totalorder %v240, 32
        %v243 = vsel %vm242, %v238, %v10
        %s244 = scalar_lea.vmem [#allocation15], 32
        %s246 = ssub.s32 256, 1
        %247 = vst [vmem:[%s244] sm:%s246] %v243
        %s248 = scalar_lea.vmem %s1, 40
        %v249 = vld [vmem:[%s248] sm:$0xff]
        %v250 = vlaneseq
        %v251 = vand.u32 %v250, 127
        %vm253 = vcmp.lt.s32.totalorder %v251, 32
        %v254 = vsel %vm253, %v249, %v10
        %s255 = scalar_lea.vmem [#allocation15], 40
        %s257 = ssub.s32 256, 1
        %258 = vst [vmem:[%s255] sm:%s257] %v254
        %s259 = scalar_lea.vmem %s1, 48
        %v260 = vld [vmem:[%s259] sm:$0xff]
        %v261 = vlaneseq
        %v262 = vand.u32 %v261, 127
        %vm264 = vcmp.lt.s32.totalorder %v262, 32
        %v265 = vsel %vm264, %v260, %v10
        %s266 = scalar_lea.vmem [#allocation15], 48
        %s268 = ssub.s32 256, 1
        %269 = vst [vmem:[%s266] sm:%s268] %v265
        %s270 = scalar_lea.vmem %s1, 56
        %v271 = vld [vmem:[%s270] sm:$0xff]
        %v272 = vlaneseq
        %v273 = vand.u32 %v272, 127
        %vm275 = vcmp.lt.s32.totalorder %v273, 32
        %v276 = vsel %vm275, %v271, %v10
        %s277 = scalar_lea.vmem [#allocation15], 56
        %s279 = ssub.s32 256, 1
        %280 = vst [vmem:[%s277] sm:%s279] %v276
        %s281 = scalar_lea.vmem [#allocation15], 64
        %s283 = ssub.s32 256, 1
        %284 = vst [vmem:[%s281] sm:%s283] %v10
        %s285 = scalar_lea.vmem [#allocation15], 72
        %s287 = ssub.s32 256, 1
        %288 = vst [vmem:[%s285] sm:%s287] %v10
        %s289 = scalar_lea.vmem [#allocation15], 80
        %s291 = ssub.s32 256, 1
        %292 = vst [vmem:[%s289] sm:%s291] %v10
        %s293 = scalar_lea.vmem [#allocation15], 88
        %s295 = ssub.s32 256, 1
        %296 = vst [vmem:[%s293] sm:%s295] %v10
        %s297 = scalar_lea.vmem [#allocation15], 96
        %s299 = ssub.s32 256, 1
        %300 = vst [vmem:[%s297] sm:%s299] %v10
        %s301 = scalar_lea.vmem [#allocation15], 104
        %s303 = ssub.s32 256, 1
        %304 = vst [vmem:[%s301] sm:%s303] %v10
        %s305 = scalar_lea.vmem [#allocation15], 112
        %s307 = ssub.s32 256, 1
        %308 = vst [vmem:[%s305] sm:%s307] %v10
        %s309 = scalar_lea.vmem [#allocation15], 120
        %s311 = ssub.s32 256, 1
        %312 = vst [vmem:[%s309] sm:%s311] %v10
        %v313 = vld [vmem:[#allocation14] sm:$0xff]
        %v314 = vld [vmem:[#allocation14 + $0x8] sm:$0xff]
        %v315 = vld [vmem:[#allocation15] sm:$0xff]
        %v316 = vld [vmem:[#allocation15 + $0x8] sm:$0xff]
        %v317 = vld [vmem:[#allocation15 + $0x10] sm:$0xff]
        %v318 = vld [vmem:[#allocation15 + $0x18] sm:$0xff]
        %v319 = vld [vmem:[#allocation15 + $0x20] sm:$0xff]
        %v320 = vld [vmem:[#allocation15 + $0x28] sm:$0xff]
        %v321 = vld [vmem:[#allocation15 + $0x30] sm:$0xff]
        %v322 = vld [vmem:[#allocation15 + $0x38] sm:$0xff]
        %v323 = vld [vmem:[#allocation15 + $0x40] sm:$0xff]
        %v324 = vld [vmem:[#allocation15 + $0x48] sm:$0xff]
        %v325 = vld [vmem:[#allocation15 + $0x50] sm:$0xff]
        %v326 = vld [vmem:[#allocation15 + $0x58] sm:$0xff]
        %v327 = vld [vmem:[#allocation15 + $0x60] sm:$0xff]
        %v328 = vld [vmem:[#allocation15 + $0x68] sm:$0xff]
        %v329 = vld [vmem:[#allocation15 + $0x70] sm:$0xff]
        %v330 = vld [vmem:[#allocation15 + $0x78] sm:$0xff]
        %v331 = vld [vmem:[%s0] sm:$0x1]
        %v333 = vlaneseq
        %v334 = vshrl.u32 %v333, 7
        %v335 = vsub.s32 0, %v334
        %v336 = vrot.slane %v331, %v335
        %338 = vmatprep.subr.mxu0 0.0
        %339 = vmatpush1.msra.mxu0 %v330
        %340 = vmatprep.subr.mxu0 0.0
        %341 = vmatpush1.msra.mxu0 %v329
        %342 = vmatprep.subr.mxu0 0.0
        %343 = vmatpush1.msra.mxu0 %v328
        %344 = vmatprep.subr.mxu0 0.0
        %345 = vmatpush1.msra.mxu0 %v327
        %346 = vmatprep.subr.mxu0 0.0
        %347 = vmatpush1.msra.mxu0 %v326
        %348 = vmatprep.subr.mxu0 0.0
        %349 = vmatpush1.msra.mxu0 %v325
        %350 = vmatprep.subr.mxu0 0.0
        %351 = vmatpush1.msra.mxu0 %v324
        %352 = vmatprep.subr.mxu0 0.0
        %353 = vmatpush1.msra.mxu0 %v323
        %354 = vmatprep.subr.mxu0 0.0
        %355 = vmatpush1.msra.mxu0 %v322
        %356 = vmatprep.subr.mxu0 0.0
        %357 = vmatpush1.msra.mxu0 %v321
        %358 = vmatprep.subr.mxu0 0.0
        %359 = vmatpush1.msra.mxu0 %v320
        %360 = vmatprep.subr.mxu0 0.0
        %361 = vmatpush1.msra.mxu0 %v319
        %362 = vmatprep.subr.mxu0 0.0
        %363 = vmatpush1.msra.mxu0 %v318
        %364 = vmatprep.subr.mxu0 0.0
        %365 = vmatpush1.msra.mxu0 %v317
        %366 = vmatprep.subr.mxu0 0.0
        %367 = vmatpush1.msra.mxu0 %v316
        %368 = vmatprep.subr.mxu0 0.0
        %369 = vmatpush1.msra.mxu0 %v315
        %370 = vmatprep.subr.mxu0 0.0
        %371 = vmatpush2.msra.mxu0 0.0
        %372 = vmatprep.subr.mxu0 0.0
        %373 = vmatpush2.msra.mxu0 0.0
        %374 = vmatprep.subr.mxu0 0.0
        %375 = vmatpush2.msra.mxu0 0.0
        %376 = vmatprep.subr.mxu0 0.0
        %377 = vmatpush2.msra.mxu0 0.0
        %378 = vmatprep.subr.mxu0 0.0
        %379 = vmatpush2.msra.mxu0 0.0
        %380 = vmatprep.subr.mxu0 0.0
        %381 = vmatpush2.msra.mxu0 0.0
        %382 = vmatprep.subr.mxu0 0.0
        %383 = vmatpush2.msra.mxu0 0.0
        %384 = vmatprep.subr.mxu0 0.0
        %385 = vmatpush2.msra.mxu0 0.0
        %386 = vmatprep.subr.mxu0 0.0
        %387 = vmatpush2.msra.mxu0 0.0
        %388 = vmatprep.subr.mxu0 0.0
        %389 = vmatpush2.msra.mxu0 0.0
        %390 = vmatprep.subr.mxu0 0.0
        %391 = vmatpush2.msra.mxu0 0.0
        %392 = vmatprep.subr.mxu0 0.0
        %393 = vmatpush2.msra.mxu0 0.0
        %394 = vmatprep.subr.mxu0 0.0
        %395 = vmatpush2.msra.mxu0 0.0
        %396 = vmatprep.subr.mxu0 0.0
        %397 = vmatpush2.msra.mxu0 0.0
        %398 = vmatprep.subr.mxu0 0.0
        %399 = vmatpush2.msra.mxu0 0.0
        %400 = vmatprep.subr.mxu0 0.0
        %401 = vmatpush2.msra.mxu0 0.0
        %402 = vmatprep.mubr.f32.mxu0 0.0
        %403 = vmatmul.mubr.f32.gmra.mxu0 %v313
        %v404 = vpop.f32.mrf.mxu0
        %v405 = vadd.f32 %v336, %v404
        %v406 = vpop.f32.mrf.mxu0
        %407 = vmatprep.mubr.f32.mxu0 0.0
        %408 = vmatmul.mubr.f32.gmra.mxu0 %v314
        %v409 = vpop.f32.mrf.mxu0
        %v410 = vadd.f32 %v336, %v409
        %v411 = vpop.f32.mrf.mxu0
        %412 = vdwg.mxu0
        %413 = vst [vmem:[%s167] sm:$0xff] %v405
        %414 = vst [vmem:[%s167 + $0x8] sm:$0xff] %v410
        %s415 = sand.u32 %s96, 1
        %s416 = scalar_lea.sflag [#allocation13], %s415
        %s417 = sand.u32 %s96, 1
        %s418 = smul.addr %s417, 16
        %s419 = scalar_lea.vmem [#allocation12], %s418
        // Predicated region
        $region33: #{patch_embed_pallas.2} parent=31 // pred_check
          %p420 = pneg %p106
        $region34: #{patch_embed_pallas.2} parent=31 // pred_check_branch
          %422 = sbr.rel (%p420) target = $region36
        $region35: #{patch_embed_pallas.2} parent=31 // pred_region
          %s423 = smul.u32 2, %s20
          %s425 = ssub.s32 256, 256
          %426 = vsyncadd %s416, %s425
          %s427 = smul.addr %s423, 128
          %s428 = scalar_lea.hbm %s4, %s427
          %s429 = sshll.u32 %s419, 4
          %s430 = int_to_ptr.vmem [resolvable:$true] %s429
          %435 = dma.vmem_to_hbm [thread:$0]  %s430, 256, %s428, %s416, 128, 128, 8
        $region36: #{patch_embed_pallas.2} parent=31 // pred_fallthru
          _
      $region32: #{patch_embed_pallas.2} parent=5 // pred_fallthru
        _
      %p436 = scmp.le.s32.totalorder 2, %s15
      // Predicated region
      $region37: #{patch_embed_pallas.2} parent=5 // pred_check
        %p437 = pneg %p436
      $region38: #{patch_embed_pallas.2} parent=5 // pred_check_branch
        %439 = sbr.rel (%p437) target = $region40
      $region39: #{patch_embed_pallas.2} parent=5 // pred_region
        %s440 = ssub.s32 %s15, 2
        // Predicated region
        $region41: #{patch_embed_pallas.2} parent=39 // pred_check
          %p441 = pneg %p112
        $region42: #{patch_embed_pallas.2} parent=39 // pred_check_branch
          %443 = sbr.rel (%p441) target = $region44
        $region43: #{patch_embed_pallas.2} parent=39 // pred_region
          %s444 = sand.u32 %s97, 1
          %s445 = scalar_lea.sflag [#allocation13], %s444
          %s446 = sand.u32 %s97, 1
          %s447 = smul.addr %s446, 16
          %s448 = scalar_lea.vmem [#allocation12], %s447
          %449 = dma.done %s445, 256
        $region44: #{patch_embed_pallas.2} parent=39 // pred_fallthru
          _
      $region40: #{patch_embed_pallas.2} parent=5 // pred_fallthru
        _
    $region6: #{patch_embed_pallas.2} parent=1 // loop_footer
      %s19 = sadd.s32 1, %s15
    $region7: #{patch_embed_pallas.2} parent=1 // loop_footer_branch
      %14 = sbr.rel target = $region3
    $region8: #{patch_embed_pallas.2} parent=1 // loop_exit
      _
    %450 = vsyncpa [#allocation13], 1
    %s451 = scalar_lea.sflag [#allocation13], 1
    %452 = vsyncpa %s451, 1

</llo_original>
